<compile_context>
chip_gen: v6e
topology: v6e:2x2x1
jax: 0.10.0
libtpu: 0.0.40
codegen_flags: <defaults>
</compile_context>

<pallas_src>
import functools

import jax
import jax.numpy as jnp
from jax.experimental import pallas as pl
from jax.experimental.pallas import tpu as pltpu


def _round_up(a, b):
    return ((a + b - 1) // b) * b


def _ffn_kernel(x_ref, w1_ref, b1_ref, w3_ref, b3_ref, w2_ref, b2_ref,
                o_ref, acc_ref):
    k = pl.program_id(1)

    @pl.when(k == 0)
    def _init():
        acc_ref[...] = jnp.zeros_like(acc_ref)

    x = x_ref[...]                                                   # (tm, d_model)
    # gate branch: silu(x @ w1_chunk + b1_chunk)
    h1 = jnp.dot(x, w1_ref[...], preferred_element_type=jnp.float32) + b1_ref[...]
    # linear branch: x @ w3_chunk + b3_chunk
    h3 = jnp.dot(x, w3_ref[...], preferred_element_type=jnp.float32) + b3_ref[...]
    g = (h1 * jax.nn.sigmoid(h1)) * h3                               # (tm, tile_ff) f32
    # accumulate this d_ff chunk's contribution to the output
    acc_ref[...] += jnp.dot(g.astype(w2_ref.dtype), w2_ref[...],
                            preferred_element_type=jnp.float32)      # (tm, d_model)

    @pl.when(k == pl.num_programs(1) - 1)
    def _finalize():
        o_ref[...] = (acc_ref[...] + b2_ref[...]).astype(o_ref.dtype)


@functools.partial(jax.jit, static_argnames=("tile_m", "tile_ff"))
def feed_forward(x, w1, b1, w2, b2, w3, b3, *, tile_m=256, tile_ff=512):
    """SwiGLU FFN.  x: (B, S, d_model); w*: PyTorch-style (out, in); b*: (out,)."""
    B, S, d_model = x.shape
    d_ff = w1.shape[0]
    T = B * S

    # --- tile sizes: sublane-aligned, clamped to the (padded) problem size ---
    sub = {4: 8, 2: 16, 1: 32}.get(jnp.dtype(x.dtype).itemsize, 8)
    tm = _round_up(max(sub, min(tile_m, _round_up(T, sub))), sub)
    tf = _round_up(max(128, min(tile_ff, _round_up(d_ff, 128))), 128)

    T_pad = _round_up(T, tm)
    F_pad = _round_up(d_ff, tf)

    # --- layout prep: x -> rows, weights -> (in, out), zero-pad T / d_ff ---
    x2 = x.reshape(T, d_model)
    if T_pad != T:
        x2 = jnp.pad(x2, ((0, T_pad - T), (0, 0)))

    w1t = w1.T                      # (d_model, d_ff)
    w3t = w3.T                      # (d_model, d_ff)
    w2t = w2.T                      # (d_ff, d_model)
    b1p, b3p = b1, b3
    if F_pad != d_ff:
        w1t = jnp.pad(w1t, ((0, 0), (0, F_pad - d_ff)))
        w3t = jnp.pad(w3t, ((0, 0), (0, F_pad - d_ff)))
        w2t = jnp.pad(w2t, ((0, F_pad - d_ff), (0, 0)))
        b1p = jnp.pad(b1, (0, F_pad - d_ff))
        b3p = jnp.pad(b3, (0, F_pad - d_ff))
    b1r = b1p.reshape(1, F_pad)
    b3r = b3p.reshape(1, F_pad)
    b2r = b2.reshape(1, d_model)

    grid = (T_pad // tm, F_pad // tf)

    # --- VMEM budget: double-buffered inputs/outputs + f32 accumulator ---
    xi = jnp.dtype(x.dtype).itemsize
    wi = jnp.dtype(w1.dtype).itemsize
    vmem_bytes = (
        2 * tm * d_model * xi                 # x tile
        + 2 * 2 * d_model * tf * wi           # w1t, w3t chunks
        + 2 * tf * d_model * wi               # w2t chunk
        + 2 * 2 * 8 * tf * wi                 # b1, b3 (padded to 8 sublanes)
        + 2 * 8 * d_model * wi                # b2
        + 2 * tm * d_model * xi               # output tile
        + tm * d_model * 4                    # f32 accumulator scratch
    )
    vmem_limit = int(min(max(vmem_bytes + (4 << 20), 32 << 20), 100 << 20))

    out = pl.pallas_call(
        _ffn_kernel,
        out_shape=jax.ShapeDtypeStruct((T_pad, d_model), x.dtype),
        grid_spec=pltpu.PrefetchScalarGridSpec(
            num_scalar_prefetch=0,
            grid=grid,
            in_specs=[
                pl.BlockSpec((tm, d_model), lambda i, k: (i, 0)),    # x rows
                pl.BlockSpec((d_model, tf), lambda i, k: (0, k)),    # w1^T chunk
                pl.BlockSpec((1, tf), lambda i, k: (0, k)),          # b1 chunk
                pl.BlockSpec((d_model, tf), lambda i, k: (0, k)),    # w3^T chunk
                pl.BlockSpec((1, tf), lambda i, k: (0, k)),          # b3 chunk
                pl.BlockSpec((tf, d_model), lambda i, k: (k, 0)),    # w2^T chunk
                pl.BlockSpec((1, d_model), lambda i, k: (0, 0)),     # b2
            ],
            out_specs=pl.BlockSpec((tm, d_model), lambda i, k: (i, 0)),
            scratch_shapes=[pltpu.VMEM((tm, d_model), jnp.float32)],
        ),
        compiler_params=pltpu.CompilerParams(
            dimension_semantics=("parallel", "arbitrary"),
            vmem_limit_bytes=vmem_limit,
        ),
    )(x2, w1t, b1r, w3t, b3r, w2t, b2r)

    return out[:T].reshape(B, S, d_model)


def _init_linear(key, out_features, in_features, dtype=jnp.float32):
    """Deterministic init mimicking torch.nn.Linear default (uniform +-1/sqrt(in))."""
    kw, kb = jax.random.split(key)
    bound = 1.0 / (in_features ** 0.5)
    w = jax.random.uniform(kw, (out_features, in_features), dtype,
                           minval=-bound, maxval=bound)
    b = jax.random.uniform(kb, (out_features,), dtype,
                           minval=-bound, maxval=bound)
    return w, b


def _reference(x, w1, b1, w2, b2, w3, b3):
    h1 = x @ w1.T + b1
    h3 = x @ w3.T + b3
    return (jax.nn.silu(h1) * h3) @ w2.T + b2


if __name__ == "__main__":
    key = jax.random.PRNGKey(0)
    k_x, k1, k2, k3 = jax.random.split(key, 4)

    # Small shapes chosen so both grid axes take multiple steps and both the
    # token-padding (T=20 -> 32) and d_ff-padding (320 -> 384) paths run.
    batch, seq = 2, 10
    d_model, d_ff = 128, 320

    x = jax.random.normal(k_x, (batch, seq, d_model), jnp.float32)
    w1, b1 = _init_linear(k1, d_ff, d_model)     # d_model -> d_ff
    w2, b2 = _init_linear(k2, d_model, d_ff)     # d_ff    -> d_model
    w3, b3 = _init_linear(k3, d_ff, d_model)     # d_model -> d_ff

    out = feed_forward(x, w1, b1, w2, b2, w3, b3, tile_m=16, tile_ff=128)
    out = jax.block_until_ready(out)

    ref = _reference(x, w1, b1, w2, b2, w3, b3)
    assert out.shape == (batch, seq, d_model)
    assert jnp.allclose(out, ref, atol=1e-4, rtol=1e-4), "mismatch vs reference"

    print("KERNEL_OK")
</pallas_src>

<mosaic_0001>
module attributes {stable_mosaic.version = 11 : i64} {
  func.func @_ffn_kernel(%arg0: i32, %arg1: i32, %arg2: memref<16x128xf32, #tpu.memory_space<vmem>>, %arg3: memref<128x128xf32, #tpu.memory_space<vmem>>, %arg4: memref<1x128xf32, #tpu.memory_space<vmem>>, %arg5: memref<128x128xf32, #tpu.memory_space<vmem>>, %arg6: memref<1x128xf32, #tpu.memory_space<vmem>>, %arg7: memref<128x128xf32, #tpu.memory_space<vmem>>, %arg8: memref<1x128xf32, #tpu.memory_space<vmem>>, %arg9: memref<16x128xf32, #tpu.memory_space<vmem>>, %arg10: memref<16x128xf32, #tpu.memory_space<vmem>>) attributes {dimension_semantics = [#tpu.dimension_semantics<parallel>, #tpu.dimension_semantics<arbitrary>], iteration_bounds = array<i64: 2, 3>, scalar_prefetch = 0 : i64, scratch_operands = 1 : i64, tpu.core_type = #tpu.core_type<tc>, window_params = [{transform_indices = @transform_0, window_bounds = array<i64: 16, 128>}, {transform_indices = @transform_1, window_bounds = array<i64: 128, 128>}, {transform_indices = @transform_2, window_bounds = array<i64: 1, 128>}, {transform_indices = @transform_3, window_bounds = array<i64: 128, 128>}, {transform_indices = @transform_4, window_bounds = array<i64: 1, 128>}, {transform_indices = @transform_5, window_bounds = array<i64: 128, 128>}, {pipeline_mode = #tpu.pipeline_mode<synchronous>, transform_indices = @transform_6, window_bounds = array<i64: 1, 128>}, {transform_indices = @transform_7, window_bounds = array<i64: 16, 128>}]} {
    %c0_i32 = arith.constant 0 : i32
    %0 = arith.cmpi eq, %arg1, %c0_i32 : i32
    %1 = arith.extui %0 : i1 to i32
    %c0_i32_0 = arith.constant 0 : i32
    %2 = arith.cmpi ne, %1, %c0_i32_0 : i32
    scf.if %2 {
      %cst_20 = arith.constant 0.000000e+00 : f32
      %29 = vector.broadcast %cst_20 : f32 to vector<16x128xf32>
      %c0_21 = arith.constant 0 : index
      %c0_22 = arith.constant 0 : index
      %30 = vector.load %arg10[%c0_21, %c0_22] : memref<16x128xf32, #tpu.memory_space<vmem>>, vector<16x128xf32>
      tpu.vector_store %arg10[%c0_21, %c0_22], %29 {strides = array<i32>} : memref<16x128xf32, #tpu.memory_space<vmem>>, vector<16x128xf32>,
    } else {
    }
    %c0 = arith.constant 0 : index
    %c0_1 = arith.constant 0 : index
    %3 = vector.load %arg2[%c0, %c0_1] : memref<16x128xf32, #tpu.memory_space<vmem>>, vector<16x128xf32>
    %c0_2 = arith.constant 0 : index
    %c0_3 = arith.constant 0 : index
    %4 = vector.load %arg3[%c0_2, %c0_3] : memref<128x128xf32, #tpu.memory_space<vmem>>, vector<128x128xf32>
    %cst = arith.constant dense<0.000000e+00> : vector<16x128xf32>
    %5 = tpu.matmul %3, %4, %cst {dimension_numbers = #tpu.dot_dimension_numbers<[1], [0], [0], [1], [0, 0, 1, 1], [], []>} : vector<16x128xf32>, vector<128x128xf32>, vector<16x128xf32> -> vector<16x128xf32>
    %c0_4 = arith.constant 0 : index
    %c0_5 = arith.constant 0 : index
    %6 = vector.load %arg4[%c0_4, %c0_5] : memref<1x128xf32, #tpu.memory_space<vmem>>, vector<1x128xf32>
    %7 = vector.broadcast %6 : vector<1x128xf32> to vector<16x128xf32>
    %8 = arith.addf %5, %7 : vector<16x128xf32>
    %c0_6 = arith.constant 0 : index
    %c0_7 = arith.constant 0 : index
    %9 = vector.load %arg5[%c0_6, %c0_7] : memref<128x128xf32, #tpu.memory_space<vmem>>, vector<128x128xf32>
    %cst_8 = arith.constant dense<0.000000e+00> : vector<16x128xf32>
    %10 = tpu.matmul %3, %9, %cst_8 {dimension_numbers = #tpu.dot_dimension_numbers<[1], [0], [0], [1], [0, 0, 1, 1], [], []>} : vector<16x128xf32>, vector<128x128xf32>, vector<16x128xf32> -> vector<16x128xf32>
    %c0_9 = arith.constant 0 : index
    %c0_10 = arith.constant 0 : index
    %11 = vector.load %arg6[%c0_9, %c0_10] : memref<1x128xf32, #tpu.memory_space<vmem>>, vector<1x128xf32>
    %12 = vector.broadcast %11 : vector<1x128xf32> to vector<16x128xf32>
    %13 = arith.addf %10, %12 : vector<16x128xf32>
    %14 = arith.negf %8 : vector<16x128xf32>
    %15 = math.exp %14 : vector<16x128xf32>
    %cst_11 = arith.constant 1.000000e+00 : f32
    %16 = vector.broadcast %cst_11 : f32 to vector<16x128xf32>
    %17 = arith.addf %16, %15 : vector<16x128xf32>
    %18 = arith.divf %16, %17 : vector<16x128xf32>
    %19 = arith.mulf %8, %18 : vector<16x128xf32>
    %20 = arith.mulf %19, %13 : vector<16x128xf32>
    %c0_12 = arith.constant 0 : index
    %c0_13 = arith.constant 0 : index
    %21 = vector.load %arg10[%c0_12, %c0_13] : memref<16x128xf32, #tpu.memory_space<vmem>>, vector<16x128xf32>
    %c0_14 = arith.constant 0 : index
    %c0_15 = arith.constant 0 : index
    %22 = vector.load %arg7[%c0_14, %c0_15] : memref<128x128xf32, #tpu.memory_space<vmem>>, vector<128x128xf32>
    %cst_16 = arith.constant dense<0.000000e+00> : vector<16x128xf32>
    %23 = tpu.matmul %20, %22, %cst_16 {dimension_numbers = #tpu.dot_dimension_numbers<[1], [0], [0], [1], [0, 0, 1, 1], [], []>} : vector<16x128xf32>, vector<128x128xf32>, vector<16x128xf32> -> vector<16x128xf32>
    %24 = arith.addf %21, %23 : vector<16x128xf32>
    %c0_17 = arith.constant 0 : index
    %c0_18 = arith.constant 0 : index
    %25 = vector.load %arg10[%c0_17, %c0_18] : memref<16x128xf32, #tpu.memory_space<vmem>>, vector<16x128xf32>
    tpu.vector_store %arg10[%c0_17, %c0_18], %24 {strides = array<i32>} : memref<16x128xf32, #tpu.memory_space<vmem>>, vector<16x128xf32>,
    %c2_i32 = arith.constant 2 : i32
    %26 = arith.cmpi eq, %arg1, %c2_i32 : i32
    %27 = arith.extui %26 : i1 to i32
    %c0_i32_19 = arith.constant 0 : i32
    %28 = arith.cmpi ne, %27, %c0_i32_19 : i32
    scf.if %28 {
      %c0_20 = arith.constant 0 : index
      %c0_21 = arith.constant 0 : index
      %29 = vector.load %arg10[%c0_20, %c0_21] : memref<16x128xf32, #tpu.memory_space<vmem>>, vector<16x128xf32>
      %c0_22 = arith.constant 0 : index
      %c0_23 = arith.constant 0 : index
      %30 = vector.load %arg8[%c0_22, %c0_23] : memref<1x128xf32, #tpu.memory_space<vmem>>, vector<1x128xf32>
      %31 = vector.broadcast %30 : vector<1x128xf32> to vector<16x128xf32>
      %32 = arith.addf %29, %31 : vector<16x128xf32>
      %c0_24 = arith.constant 0 : index
      %c0_25 = arith.constant 0 : index
      %33 = vector.load %arg9[%c0_24, %c0_25] : memref<16x128xf32, #tpu.memory_space<vmem>>, vector<16x128xf32>
      tpu.vector_store %arg9[%c0_24, %c0_25], %32 {strides = array<i32>} : memref<16x128xf32, #tpu.memory_space<vmem>>, vector<16x128xf32>,
    } else {
    }
    return
  }
  func.func @transform_0(%arg0: i32, %arg1: i32) -> (i32, i32) {
    %c0_i32 = arith.constant 0 : i32
    %c0_i32_0 = arith.constant 0 : i32
    return %arg0, %c0_i32 : i32, i32
  }
  func.func @transform_1(%arg0: i32, %arg1: i32) -> (i32, i32) {
    %c0_i32 = arith.constant 0 : i32
    %c0_i32_0 = arith.constant 0 : i32
    return %c0_i32, %arg1 : i32, i32
  }
  func.func @transform_2(%arg0: i32, %arg1: i32) -> (i32, i32) {
    %c0_i32 = arith.constant 0 : i32
    %c0_i32_0 = arith.constant 0 : i32
    return %c0_i32, %arg1 : i32, i32
  }
  func.func @transform_3(%arg0: i32, %arg1: i32) -> (i32, i32) {
    %c0_i32 = arith.constant 0 : i32
    %c0_i32_0 = arith.constant 0 : i32
    return %c0_i32, %arg1 : i32, i32
  }
  func.func @transform_4(%arg0: i32, %arg1: i32) -> (i32, i32) {
    %c0_i32 = arith.constant 0 : i32
    %c0_i32_0 = arith.constant 0 : i32
    return %c0_i32, %arg1 : i32, i32
  }
  func.func @transform_5(%arg0: i32, %arg1: i32) -> (i32, i32) {
    %c0_i32 = arith.constant 0 : i32
    %c0_i32_0 = arith.constant 0 : i32
    return %arg1, %c0_i32 : i32, i32
  }
  func.func @transform_6(%arg0: i32, %arg1: i32) -> (i32, i32) {
    %c0_i32 = arith.constant 0 : i32
    %c0_i32_0 = arith.constant 0 : i32
    %c0_i32_1 = arith.constant 0 : i32
    return %c0_i32, %c0_i32_0 : i32, i32
  }
  func.func @transform_7(%arg0: i32, %arg1: i32) -> (i32, i32) {
    %c0_i32 = arith.constant 0 : i32
    %c0_i32_0 = arith.constant 0 : i32
    return %arg0, %c0_i32 : i32, i32
  }
}

</mosaic_0001>

<llo_original>
// kernel: feed_forward.1
$region0: #{feed_forward.1}
  #allocation0 [shape = 'u32[]', space=smem, size = 0x4, offset = 0x4, fixed_abs, tag = 'smem constant byte address 0x4 - core index']
  #allocation1 [shape = 'u32[144,128]{1,0:T(1,128)}', space=vmem, size = 0x12000, scoped, tag = 'internal scratch']
  #allocation2 [shape = 'f32[16,128]{1,0:T(8,128)}', space=vmem, size = 0x2000, scoped, tag = 'scratch operand']
  %s0 = inlined_call_operand.vmem [shape: f32[32,128], index: 0, kind: input, shape index: {}]
  %s1 = inlined_call_operand.vmem [shape: f32[128,384], index: 1, kind: input, shape index: {}]
  %s2 = inlined_call_operand.vmem [shape: f32[1,384], index: 2, kind: input, shape index: {}]
  %s3 = inlined_call_operand.vmem [shape: f32[128,384], index: 3, kind: input, shape index: {}]
  %s4 = inlined_call_operand.vmem [shape: f32[1,384], index: 4, kind: input, shape index: {}]
  %s5 = inlined_call_operand.vmem [shape: f32[384,128], index: 5, kind: input, shape index: {}]
  %s6 = inlined_call_operand.vmem [shape: f32[1,128], index: 6, kind: input, shape index: {}]
  %s7 = inlined_call_operand.vmem [shape: f32[32,128], index: 7, kind: output, shape index: {}]
  %s8 = sld [smem:[#allocation0]]
  $region145: #{feed_forward.1} parent=0
    _
  %s10 = ssub.s32 1, %s8
  %s11 = scalar_select 0, %s10, %s8
  $region1: #{feed_forward.1} parent=0
    #allocation3 [shape = 'u8[131072]{0}', space=vmem, size = 0x20000, scoped, tag = 'input window, operand 1']
    #allocation4 [shape = 'u8[131072]{0}', space=vmem, size = 0x20000, scoped, tag = 'input window, operand 3']
    loop: start=0, step=1, limit=8
    $region2: #{feed_forward.1} parent=1 // loop_pre_header
      _
    $region3: #{feed_forward.1} parent=1 // loop_header
      %s13 = sphi 0, %s17
      %p14 = scmp.ge.s32.totalorder %s13, 8
      %s20 = sphi 0, %s32
      %s21 = sphi 0, %s28
      %s22 = sphi 0, %s20
      %s23 = sphi 0, %s21
      %s24 = sphi 0, %s22
      %s25 = sphi 0, %s23
      %s35 = sphi 0, %s37
      %s38 = sphi 0, %s35
      %s39 = sphi 0, %s38
      %s55 = sphi 0, %s39
      %s61 = sphi 0, %s63
      %s64 = sphi 0, %s61
      %s65 = sphi 0, %s64
      %s81 = sphi 0, %s65
      %s87 = sphi 0, %s89
      %s90 = sphi 0, %s87
      %s91 = sphi 0, %s90
      %s107 = sphi 0, %s91
      %s113 = sphi 0, %s115
      %s116 = sphi 0, %s113
      %s117 = sphi 0, %s116
      %s133 = sphi 0, %s117
      %s139 = sphi 0, %s141
      %s142 = sphi 0, %s139
      %s143 = sphi 0, %s142
      %s159 = sphi 0, %s143
      %s165 = sphi 0, %s167
      %s168 = sphi 0, %s165
      %s169 = sphi 0, %s168
      %s185 = sphi 0, %s169
      %s189 = sphi 0, %s189
      %s191 = sphi 0, %s189
      %s192 = sphi 0, %s191
      %s206 = sphi 0, %s192
      %s212 = sphi 0, %s214
      %s215 = sphi 0, %s212
      %s216 = sphi 0, %s215
      %s232 = sphi 0, %s216
    $region4: #{feed_forward.1} parent=1 // loop_header_branch
      %16 = sbr.rel (%p14) target = $region8
    $region5: #{feed_forward.1} parent=1 // loop_body
      %s18 = ssub.s32 %s13, 1
      %s19 = ssub.s32 %s13, 2
      %s26 = sadd.s32 1, %s21
      %p27 = scmp.ge.s32.totalorder %s26, 3
      %s28 = scalar_select %p27, 0, %s26
      %s29 = sadd.s32 1, %s20
      %s30 = scalar_select %p27, %s29, %s20
      %p31 = scmp.ge.s32.totalorder %s30, 2
      %s32 = scalar_select %p31, 0, %s30
      %s33 = ssub.s32 %s20, %s32
      %p34 = scmp.eq.s32.totalorder %s33, 0
      %s36 = sadd.s32 %s35, 1
      %s37 = scalar_select %p34, %s35, %s36
      %p40 = pneg %p34
      %p41 = scmp.eq.s32.totalorder %s13, 5
      %p42 = por %p40, %p41
      %p43 = scmp.ne.s32.totalorder %s35, %s38
      %p44 = scmp.eq.s32.totalorder %s13, 0
      %p45 = por %p43, %p44
      %p46 = scmp.ne.s32.totalorder %s35, %s38
      %p47 = scmp.eq.s32.totalorder %s18, 5
      %p48 = por %p46, %p47
      %p49 = scmp.ne.s32.totalorder %s38, %s39
      %p50 = scmp.eq.s32.totalorder %s18, 0
      %p51 = por %p49, %p50
      %p52 = scmp.ne.s32.totalorder %s38, %s39
      %p53 = scmp.eq.s32.totalorder %s19, 5
      %p54 = por %p52, %p53
      %p56 = scmp.ne.s32.totalorder %s39, %s55
      %p57 = scmp.eq.s32.totalorder %s19, 0
      %p58 = por %p56, %p57
      %s59 = ssub.s32 %s21, %s28
      %p60 = scmp.eq.s32.totalorder %s59, 0
      %s62 = sadd.s32 %s61, 1
      %s63 = scalar_select %p60, %s61, %s62
      %p66 = pneg %p60
      %p67 = scmp.eq.s32.totalorder %s13, 5
      %p68 = por %p66, %p67
      %p69 = scmp.ne.s32.totalorder %s61, %s64
      %p70 = scmp.eq.s32.totalorder %s13, 0
      %p71 = por %p69, %p70
      %p72 = scmp.ne.s32.totalorder %s61, %s64
      %p73 = scmp.eq.s32.totalorder %s18, 5
      %p74 = por %p72, %p73
      %p75 = scmp.ne.s32.totalorder %s64, %s65
      %p76 = scmp.eq.s32.totalorder %s18, 0
      %p77 = por %p75, %p76
      %p78 = scmp.ne.s32.totalorder %s64, %s65
      %p79 = scmp.eq.s32.totalorder %s19, 5
      %p80 = por %p78, %p79
      %p82 = scmp.ne.s32.totalorder %s65, %s81
      %p83 = scmp.eq.s32.totalorder %s19, 0
      %p84 = por %p82, %p83
      %s85 = ssub.s32 %s21, %s28
      %p86 = scmp.eq.s32.totalorder %s85, 0
      %s88 = sadd.s32 %s87, 1
      %s89 = scalar_select %p86, %s87, %s88
      %p92 = pneg %p86
      %p93 = scmp.eq.s32.totalorder %s13, 5
      %p94 = por %p92, %p93
      %p95 = scmp.ne.s32.totalorder %s87, %s90
      %p96 = scmp.eq.s32.totalorder %s13, 0
      %p97 = por %p95, %p96
      %p98 = scmp.ne.s32.totalorder %s87, %s90
      %p99 = scmp.eq.s32.totalorder %s18, 5
      %p100 = por %p98, %p99
      %p101 = scmp.ne.s32.totalorder %s90, %s91
      %p102 = scmp.eq.s32.totalorder %s18, 0
      %p103 = por %p101, %p102
      %p104 = scmp.ne.s32.totalorder %s90, %s91
      %p105 = scmp.eq.s32.totalorder %s19, 5
      %p106 = por %p104, %p105
      %p108 = scmp.ne.s32.totalorder %s91, %s107
      %p109 = scmp.eq.s32.totalorder %s19, 0
      %p110 = por %p108, %p109
      %s111 = ssub.s32 %s21, %s28
      %p112 = scmp.eq.s32.totalorder %s111, 0
      %s114 = sadd.s32 %s113, 1
      %s115 = scalar_select %p112, %s113, %s114
      %p118 = pneg %p112
      %p119 = scmp.eq.s32.totalorder %s13, 5
      %p120 = por %p118, %p119
      %p121 = scmp.ne.s32.totalorder %s113, %s116
      %p122 = scmp.eq.s32.totalorder %s13, 0
      %p123 = por %p121, %p122
      %p124 = scmp.ne.s32.totalorder %s113, %s116
      %p125 = scmp.eq.s32.totalorder %s18, 5
      %p126 = por %p124, %p125
      %p127 = scmp.ne.s32.totalorder %s116, %s117
      %p128 = scmp.eq.s32.totalorder %s18, 0
      %p129 = por %p127, %p128
      %p130 = scmp.ne.s32.totalorder %s116, %s117
      %p131 = scmp.eq.s32.totalorder %s19, 5
      %p132 = por %p130, %p131
      %p134 = scmp.ne.s32.totalorder %s117, %s133
      %p135 = scmp.eq.s32.totalorder %s19, 0
      %p136 = por %p134, %p135
      %s137 = ssub.s32 %s21, %s28
      %p138 = scmp.eq.s32.totalorder %s137, 0
      %s140 = sadd.s32 %s139, 1
      %s141 = scalar_select %p138, %s139, %s140
      %p144 = pneg %p138
      %p145 = scmp.eq.s32.totalorder %s13, 5
      %p146 = por %p144, %p145
      %p147 = scmp.ne.s32.totalorder %s139, %s142
      %p148 = scmp.eq.s32.totalorder %s13, 0
      %p149 = por %p147, %p148
      %p150 = scmp.ne.s32.totalorder %s139, %s142
      %p151 = scmp.eq.s32.totalorder %s18, 5
      %p152 = por %p150, %p151
      %p153 = scmp.ne.s32.totalorder %s142, %s143
      %p154 = scmp.eq.s32.totalorder %s18, 0
      %p155 = por %p153, %p154
      %p156 = scmp.ne.s32.totalorder %s142, %s143
      %p157 = scmp.eq.s32.totalorder %s19, 5
      %p158 = por %p156, %p157
      %p160 = scmp.ne.s32.totalorder %s143, %s159
      %p161 = scmp.eq.s32.totalorder %s19, 0
      %p162 = por %p160, %p161
      %s163 = ssub.s32 %s21, %s28
      %p164 = scmp.eq.s32.totalorder %s163, 0
      %s166 = sadd.s32 %s165, 1
      %s167 = scalar_select %p164, %s165, %s166
      %p170 = pneg %p164
      %p171 = scmp.eq.s32.totalorder %s13, 5
      %p172 = por %p170, %p171
      %p173 = scmp.ne.s32.totalorder %s165, %s168
      %p174 = scmp.eq.s32.totalorder %s13, 0
      %p175 = por %p173, %p174
      %p176 = scmp.ne.s32.totalorder %s165, %s168
      %p177 = scmp.eq.s32.totalorder %s18, 5
      %p178 = por %p176, %p177
      %p179 = scmp.ne.s32.totalorder %s168, %s169
      %p180 = scmp.eq.s32.totalorder %s18, 0
      %p181 = por %p179, %p180
      %p182 = scmp.ne.s32.totalorder %s168, %s169
      %p183 = scmp.eq.s32.totalorder %s19, 5
      %p184 = por %p182, %p183
      %p186 = scmp.ne.s32.totalorder %s169, %s185
      %p187 = scmp.eq.s32.totalorder %s19, 0
      %p188 = por %p186, %p187
      %s190 = sadd.s32 %s189, 1
      %p193 = scmp.eq.s32.totalorder %s13, 5
      %p194 = scmp.ne.s32.totalorder %s189, %s191
      %p195 = scmp.eq.s32.totalorder %s13, 0
      %p196 = por %p194, %p195
      %p197 = scmp.ne.s32.totalorder %s189, %s191
      %p198 = scmp.eq.s32.totalorder %s18, 5
      %p199 = por %p197, %p198
      %p200 = scmp.ne.s32.totalorder %s191, %s192
      %p201 = scmp.eq.s32.totalorder %s18, 0
      %p202 = por %p200, %p201
      %p203 = scmp.ne.s32.totalorder %s191, %s192
      %p204 = scmp.eq.s32.totalorder %s19, 5
      %p205 = por %p203, %p204
      %p207 = scmp.ne.s32.totalorder %s192, %s206
      %p208 = scmp.eq.s32.totalorder %s19, 0
      %p209 = por %p207, %p208
      %s210 = ssub.s32 %s20, %s32
      %p211 = scmp.eq.s32.totalorder %s210, 0
      %s213 = sadd.s32 %s212, 1
      %s214 = scalar_select %p211, %s212, %s213
      %p217 = pneg %p211
      %p218 = scmp.eq.s32.totalorder %s13, 5
      %p219 = por %p217, %p218
      %p220 = scmp.ne.s32.totalorder %s212, %s215
      %p221 = scmp.eq.s32.totalorder %s13, 0
      %p222 = por %p220, %p221
      %p223 = scmp.ne.s32.totalorder %s212, %s215
      %p224 = scmp.eq.s32.totalorder %s18, 5
      %p225 = por %p223, %p224
      %p226 = scmp.ne.s32.totalorder %s215, %s216
      %p227 = scmp.eq.s32.totalorder %s18, 0
      %p228 = por %p226, %p227
      %p229 = scmp.ne.s32.totalorder %s215, %s216
      %p230 = scmp.eq.s32.totalorder %s19, 5
      %p231 = por %p229, %p230
      %p233 = scmp.ne.s32.totalorder %s216, %s232
      %p234 = scmp.eq.s32.totalorder %s19, 0
      %p235 = por %p233, %p234
      %p236 = scmp.le.s32.totalorder 1, %s13
      %p237 = scmp.lt.s32.totalorder %s13, 7
      %p238 = pnand %p236, %p237
      %p239 = pneg %p238
      // Predicated region
      $region9: #{feed_forward.1} parent=5 // pred_check
        _
      $region10: #{feed_forward.1} parent=5 // pred_check_branch
        %241 = sbr.rel (%p238) target = $region12
      $region11: #{feed_forward.1} parent=5 // pred_region
        %s242 = ssub.s32 %s13, 1
        // Predicated region
        $region13: #{feed_forward.1} parent=11 // pred_check
          %p243 = pneg %p202
        $region14: #{feed_forward.1} parent=11 // pred_check_branch
          %245 = sbr.rel (%p243) target = $region16
        $region15: #{feed_forward.1} parent=11 // pred_region
          _
        $region16: #{feed_forward.1} parent=11 // pred_fallthru
          _
      $region12: #{feed_forward.1} parent=5 // pred_fallthru
        _
      %p246 = scmp.lt.s32.totalorder %s13, 6
      // Predicated region
      $region17: #{feed_forward.1} parent=5 // pred_check
        %p247 = pneg %p246
      $region18: #{feed_forward.1} parent=5 // pred_check_branch
        %249 = sbr.rel (%p247) target = $region20
      $region19: #{feed_forward.1} parent=5 // pred_region
        // Predicated region
        $region21: #{feed_forward.1} parent=19 // pred_check
          %p250 = pneg %p45
        $region22: #{feed_forward.1} parent=19 // pred_check_branch
          %252 = sbr.rel (%p250) target = $region24
        $region23: #{feed_forward.1} parent=19 // pred_region
          %s253 = smul.u32 2, %s20
          %p254 = scmp.lt.s32.totalorder %s253, 3
          %s255 = scalar_select %p254, %s253, 3
          %s256 = smul.addr %s255, 8
          %s257 = scalar_lea.vmem %s0, %s256
          %s258 = smul.u32 2, %s20
        $region24: #{feed_forward.1} parent=19 // pred_fallthru
          _
        // Predicated region
        $region25: #{feed_forward.1} parent=19 // pred_check
          %p259 = pneg %p71
        $region26: #{feed_forward.1} parent=19 // pred_check_branch
          %261 = sbr.rel (%p259) target = $region28
        $region27: #{feed_forward.1} parent=19 // pred_region
          %s262 = sand.u32 %s61, 1
          %s263 = sand.u32 %s61, 1
          %s264 = smul.addr %s263, 128
          %s265 = scalar_lea.vmem [#allocation3], %s264
          %s266 = smul.addr %s21, 8
          %s267 = scalar_lea.vmem %s1, %s266
          // Predicated region
          $region29: #{feed_forward.1} parent=27 // pred_check
            _
          $region30: #{feed_forward.1} parent=27 // pred_check_branch
            %269 = sbr.rel (0) target = $region32
          $region31: #{feed_forward.1} parent=27 // pred_region
            // Predicated region
            $region33: #{feed_forward.1} parent=31 // pred_check
              _
            $region34: #{feed_forward.1} parent=31 // pred_check_branch
              %271 = sbr.rel (0) target = $region36
            $region35: #{feed_forward.1} parent=31 // pred_region
              // Predicated region
              $region48: #{feed_forward.1} parent=35 // pred_check
                _
              $region49: #{feed_forward.1} parent=35 // pred_check_branch
                %317 = sbr.rel (0) target = $region51
              $region50: #{feed_forward.1} parent=35 // pred_region
                loop: start=0, step=1, limit=1
                $region52: #{feed_forward.1} parent=50 // loop_pre_header
                  _
                $region53: #{feed_forward.1} parent=50 // loop_header
                  %s319 = sphi 0, %s323
                  %p320 = scmp.ge.s32.totalorder %s319, 1
                  %s324 = sphi %s267, %s267
                  %s325 = sphi %s265, %s265
                $region54: #{feed_forward.1} parent=50 // loop_header_branch
                  %322 = sbr.rel (%p320) target = $region58
                $region55: #{feed_forward.1} parent=50 // loop_body
                  %v326 = vld [vmem:[%s324] sm:$0xff]
                  %327 = vst [vmem:[%s325] sm:$0xff] %v326
                  %v328 = vld [vmem:[%s324 + $0x18] sm:$0xff]
                  %329 = vst [vmem:[%s325 + $0x8] sm:$0xff] %v328
                  %v330 = vld [vmem:[%s324 + $0x30] sm:$0xff]
                  %331 = vst [vmem:[%s325 + $0x10] sm:$0xff] %v330
                  %v332 = vld [vmem:[%s324 + $0x48] sm:$0xff]
                  %333 = vst [vmem:[%s325 + $0x18] sm:$0xff] %v332
                  %v334 = vld [vmem:[%s324 + $0x60] sm:$0xff]
                  %335 = vst [vmem:[%s325 + $0x20] sm:$0xff] %v334
                  %v336 = vld [vmem:[%s324 + $0x78] sm:$0xff]
                  %337 = vst [vmem:[%s325 + $0x28] sm:$0xff] %v336
                  %v338 = vld [vmem:[%s324 + $0x90] sm:$0xff]
                  %339 = vst [vmem:[%s325 + $0x30] sm:$0xff] %v338
                  %v340 = vld [vmem:[%s324 + $0xa8] sm:$0xff]
                  %341 = vst [vmem:[%s325 + $0x38] sm:$0xff] %v340
                  %v342 = vld [vmem:[%s324 + $0xc0] sm:$0xff]
                  %343 = vst [vmem:[%s325 + $0x40] sm:$0xff] %v342
                  %v344 = vld [vmem:[%s324 + $0xd8] sm:$0xff]
                  %345 = vst [vmem:[%s325 + $0x48] sm:$0xff] %v344
                  %v346 = vld [vmem:[%s324 + $0xf0] sm:$0xff]
                  %347 = vst [vmem:[%s325 + $0x50] sm:$0xff] %v346
                  %v348 = vld [vmem:[%s324 + $0x108] sm:$0xff]
                  %349 = vst [vmem:[%s325 + $0x58] sm:$0xff] %v348
                  %v350 = vld [vmem:[%s324 + $0x120] sm:$0xff]
                  %351 = vst [vmem:[%s325 + $0x60] sm:$0xff] %v350
                  %v352 = vld [vmem:[%s324 + $0x138] sm:$0xff]
                  %353 = vst [vmem:[%s325 + $0x68] sm:$0xff] %v352
                  %v354 = vld [vmem:[%s324 + $0x150] sm:$0xff]
                  %355 = vst [vmem:[%s325 + $0x70] sm:$0xff] %v354
                  %v356 = vld [vmem:[%s324 + $0x168] sm:$0xff]
                  %357 = vst [vmem:[%s325 + $0x78] sm:$0xff] %v356
                $region56: #{feed_forward.1} parent=50 // loop_footer
                  %s323 = sadd.s32 1, %s319
                $region57: #{feed_forward.1} parent=50 // loop_footer_branch
                  %318 = sbr.rel target = $region53
                $region58: #{feed_forward.1} parent=50 // loop_exit
                  _
              $region51: #{feed_forward.1} parent=35 // pred_fallthru
                _
              // Predicated region
              $region59: #{feed_forward.1} parent=35 // pred_check
                _
              $region60: #{feed_forward.1} parent=35 // pred_check_branch
                %359 = sbr.rel target = $region62
              $region61: #{feed_forward.1} parent=35 // pred_region
                _
              $region62: #{feed_forward.1} parent=35 // pred_fallthru
                _
            $region36: #{feed_forward.1} parent=31 // pred_fallthru
              _
            // Predicated region
            $region37: #{feed_forward.1} parent=31 // pred_check
              _
            $region38: #{feed_forward.1} parent=31 // pred_check_branch
              %273 = sbr.rel target = $region40
            $region39: #{feed_forward.1} parent=31 // pred_region
              %s275 = ssub.s32 256, 1
              loop: start=0, step=1, limit=1
              $region41: #{feed_forward.1} parent=39 // loop_pre_header
                _
              $region42: #{feed_forward.1} parent=39 // loop_header
                %s277 = sphi 0, %s281
                %p278 = scmp.ge.s32.totalorder %s277, 1
                %s282 = sphi %s267, %s267
                %s283 = sphi %s265, %s265
              $region43: #{feed_forward.1} parent=39 // loop_header_branch
                %280 = sbr.rel (%p278) target = $region47
              $region44: #{feed_forward.1} parent=39 // loop_body
                %v284 = vld [vmem:[%s282] sm:%s275]
                %285 = vst [vmem:[%s283] sm:%s275] %v284
                %v286 = vld [vmem:[%s282 + $0x18] sm:%s275]
                %287 = vst [vmem:[%s283 + $0x8] sm:%s275] %v286
                %v288 = vld [vmem:[%s282 + $0x30] sm:%s275]
                %289 = vst [vmem:[%s283 + $0x10] sm:%s275] %v288
                %v290 = vld [vmem:[%s282 + $0x48] sm:%s275]
                %291 = vst [vmem:[%s283 + $0x18] sm:%s275] %v290
                %v292 = vld [vmem:[%s282 + $0x60] sm:%s275]
                %293 = vst [vmem:[%s283 + $0x20] sm:%s275] %v292
                %v294 = vld [vmem:[%s282 + $0x78] sm:%s275]
                %295 = vst [vmem:[%s283 + $0x28] sm:%s275] %v294
                %v296 = vld [vmem:[%s282 + $0x90] sm:%s275]
                %297 = vst [vmem:[%s283 + $0x30] sm:%s275] %v296
                %v298 = vld [vmem:[%s282 + $0xa8] sm:%s275]
                %299 = vst [vmem:[%s283 + $0x38] sm:%s275] %v298
                %v300 = vld [vmem:[%s282 + $0xc0] sm:%s275]
                %301 = vst [vmem:[%s283 + $0x40] sm:%s275] %v300
                %v302 = vld [vmem:[%s282 + $0xd8] sm:%s275]
                %303 = vst [vmem:[%s283 + $0x48] sm:%s275] %v302
                %v304 = vld [vmem:[%s282 + $0xf0] sm:%s275]
                %305 = vst [vmem:[%s283 + $0x50] sm:%s275] %v304
                %v306 = vld [vmem:[%s282 + $0x108] sm:%s275]
                %307 = vst [vmem:[%s283 + $0x58] sm:%s275] %v306
                %v308 = vld [vmem:[%s282 + $0x120] sm:%s275]
                %309 = vst [vmem:[%s283 + $0x60] sm:%s275] %v308
                %v310 = vld [vmem:[%s282 + $0x138] sm:%s275]
                %311 = vst [vmem:[%s283 + $0x68] sm:%s275] %v310
                %v312 = vld [vmem:[%s282 + $0x150] sm:%s275]
                %313 = vst [vmem:[%s283 + $0x70] sm:%s275] %v312
                %v314 = vld [vmem:[%s282 + $0x168] sm:%s275]
                %315 = vst [vmem:[%s283 + $0x78] sm:%s275] %v314
              $region45: #{feed_forward.1} parent=39 // loop_footer
                %s281 = sadd.s32 1, %s277
              $region46: #{feed_forward.1} parent=39 // loop_footer_branch
                %276 = sbr.rel target = $region42
              $region47: #{feed_forward.1} parent=39 // loop_exit
                _
            $region40: #{feed_forward.1} parent=31 // pred_fallthru
              _
          $region32: #{feed_forward.1} parent=27 // pred_fallthru
            _
          %360 = vnop
        $region28: #{feed_forward.1} parent=19 // pred_fallthru
          _
        // Predicated region
        $region63: #{feed_forward.1} parent=19 // pred_check
          %p361 = pneg %p97
        $region64: #{feed_forward.1} parent=19 // pred_check_branch
          %363 = sbr.rel (%p361) target = $region66
        $region65: #{feed_forward.1} parent=19 // pred_region
          %p364 = scmp.lt.s32.totalorder %s21, 2
          %s365 = scalar_select %p364, %s21, 2
          %s366 = scalar_lea.vmem %s2, %s365
        $region66: #{feed_forward.1} parent=19 // pred_fallthru
          _
        // Predicated region
        $region67: #{feed_forward.1} parent=19 // pred_check
          %p367 = pneg %p123
        $region68: #{feed_forward.1} parent=19 // pred_check_branch
          %369 = sbr.rel (%p367) target = $region70
        $region69: #{feed_forward.1} parent=19 // pred_region
          %s370 = sand.u32 %s113, 1
          %s371 = sand.u32 %s113, 1
          %s372 = smul.addr %s371, 128
          %s373 = scalar_lea.vmem [#allocation4], %s372
          %s374 = smul.addr %s21, 8
          %s375 = scalar_lea.vmem %s3, %s374
          // Predicated region
          $region71: #{feed_forward.1} parent=69 // pred_check
            _
          $region72: #{feed_forward.1} parent=69 // pred_check_branch
            %377 = sbr.rel (0) target = $region74
          $region73: #{feed_forward.1} parent=69 // pred_region
            // Predicated region
            $region75: #{feed_forward.1} parent=73 // pred_check
              _
            $region76: #{feed_forward.1} parent=73 // pred_check_branch
              %379 = sbr.rel (0) target = $region78
            $region77: #{feed_forward.1} parent=73 // pred_region
              // Predicated region
              $region90: #{feed_forward.1} parent=77 // pred_check
                _
              $region91: #{feed_forward.1} parent=77 // pred_check_branch
                %425 = sbr.rel (0) target = $region93
              $region92: #{feed_forward.1} parent=77 // pred_region
                loop: start=0, step=1, limit=1
                $region94: #{feed_forward.1} parent=92 // loop_pre_header
                  _
                $region95: #{feed_forward.1} parent=92 // loop_header
                  %s427 = sphi 0, %s431
                  %p428 = scmp.ge.s32.totalorder %s427, 1
                  %s432 = sphi %s375, %s375
                  %s433 = sphi %s373, %s373
                $region96: #{feed_forward.1} parent=92 // loop_header_branch
                  %430 = sbr.rel (%p428) target = $region100
                $region97: #{feed_forward.1} parent=92 // loop_body
                  %v434 = vld [vmem:[%s432] sm:$0xff]
                  %435 = vst [vmem:[%s433] sm:$0xff] %v434
                  %v436 = vld [vmem:[%s432 + $0x18] sm:$0xff]
                  %437 = vst [vmem:[%s433 + $0x8] sm:$0xff] %v436
                  %v438 = vld [vmem:[%s432 + $0x30] sm:$0xff]
                  %439 = vst [vmem:[%s433 + $0x10] sm:$0xff] %v438
                  %v440 = vld [vmem:[%s432 + $0x48] sm:$0xff]
                  %441 = vst [vmem:[%s433 + $0x18] sm:$0xff] %v440
                  %v442 = vld [vmem:[%s432 + $0x60] sm:$0xff]
                  %443 = vst [vmem:[%s433 + $0x20] sm:$0xff] %v442
                  %v444 = vld [vmem:[%s432 + $0x78] sm:$0xff]
                  %445 = vst [vmem:[%s433 + $0x28] sm:$0xff] %v444
                  %v446 = vld [vmem:[%s432 + $0x90] sm:$0xff]
                  %447 = vst [vmem:[%s433 + $0x30] sm:$0xff] %v446
                  %v448 = vld [vmem:[%s432 + $0xa8] sm:$0xff]
                  %449 = vst [vmem:[%s433 + $0x38] sm:$0xff] %v448
                  %v450 = vld [vmem:[%s432 + $0xc0] sm:$0xff]
                  %451 = vst [vmem:[%s433 + $0x40] sm:$0xff] %v450
                  %v452 = vld [vmem:[%s432 + $0xd8] sm:$0xff]
                  %453 = vst [vmem:[%s433 + $0x48] sm:$0xff] %v452
                  %v454 = vld [vmem:[%s432 + $0xf0] sm:$0xff]
                  %455 = vst [vmem:[%s433 + $0x50] sm:$0xff] %v454
                  %v456 = vld [vmem:[%s432 + $0x108] sm:$0xff]
                  %457 = vst [vmem:[%s433 + $0x58] sm:$0xff] %v456
                  %v458 = vld [vmem:[%s432 + $0x120] sm:$0xff]
                  %459 = vst [vmem:[%s433 + $0x60] sm:$0xff] %v458
                  %v460 = vld [vmem:[%s432 + $0x138] sm:$0xff]
                  %461 = vst [vmem:[%s433 + $0x68] sm:$0xff] %v460
                  %v462 = vld [vmem:[%s432 + $0x150] sm:$0xff]
                  %463 = vst [vmem:[%s433 + $0x70] sm:$0xff] %v462
                  %v464 = vld [vmem:[%s432 + $0x168] sm:$0xff]
                  %465 = vst [vmem:[%s433 + $0x78] sm:$0xff] %v464
                $region98: #{feed_forward.1} parent=92 // loop_footer
                  %s431 = sadd.s32 1, %s427
                $region99: #{feed_forward.1} parent=92 // loop_footer_branch
                  %426 = sbr.rel target = $region95
                $region100: #{feed_forward.1} parent=92 // loop_exit
                  _
              $region93: #{feed_forward.1} parent=77 // pred_fallthru
                _
              // Predicated region
              $region101: #{feed_forward.1} parent=77 // pred_check
                _
              $region102: #{feed_forward.1} parent=77 // pred_check_branch
                %467 = sbr.rel target = $region104
              $region103: #{feed_forward.1} parent=77 // pred_region
                _
              $region104: #{feed_forward.1} parent=77 // pred_fallthru
                _
            $region78: #{feed_forward.1} parent=73 // pred_fallthru
              _
            // Predicated region
            $region79: #{feed_forward.1} parent=73 // pred_check
              _
            $region80: #{feed_forward.1} parent=73 // pred_check_branch
              %381 = sbr.rel target = $region82
            $region81: #{feed_forward.1} parent=73 // pred_region
              %s383 = ssub.s32 256, 1
              loop: start=0, step=1, limit=1
              $region83: #{feed_forward.1} parent=81 // loop_pre_header
                _
              $region84: #{feed_forward.1} parent=81 // loop_header
                %s385 = sphi 0, %s389
                %p386 = scmp.ge.s32.totalorder %s385, 1
                %s390 = sphi %s375, %s375
                %s391 = sphi %s373, %s373
              $region85: #{feed_forward.1} parent=81 // loop_header_branch
                %388 = sbr.rel (%p386) target = $region89
              $region86: #{feed_forward.1} parent=81 // loop_body
                %v392 = vld [vmem:[%s390] sm:%s383]
                %393 = vst [vmem:[%s391] sm:%s383] %v392
                %v394 = vld [vmem:[%s390 + $0x18] sm:%s383]
                %395 = vst [vmem:[%s391 + $0x8] sm:%s383] %v394
                %v396 = vld [vmem:[%s390 + $0x30] sm:%s383]
                %397 = vst [vmem:[%s391 + $0x10] sm:%s383] %v396
                %v398 = vld [vmem:[%s390 + $0x48] sm:%s383]
                %399 = vst [vmem:[%s391 + $0x18] sm:%s383] %v398
                %v400 = vld [vmem:[%s390 + $0x60] sm:%s383]
                %401 = vst [vmem:[%s391 + $0x20] sm:%s383] %v400
                %v402 = vld [vmem:[%s390 + $0x78] sm:%s383]
                %403 = vst [vmem:[%s391 + $0x28] sm:%s383] %v402
                %v404 = vld [vmem:[%s390 + $0x90] sm:%s383]
                %405 = vst [vmem:[%s391 + $0x30] sm:%s383] %v404
                %v406 = vld [vmem:[%s390 + $0xa8] sm:%s383]
                %407 = vst [vmem:[%s391 + $0x38] sm:%s383] %v406
                %v408 = vld [vmem:[%s390 + $0xc0] sm:%s383]
                %409 = vst [vmem:[%s391 + $0x40] sm:%s383] %v408
                %v410 = vld [vmem:[%s390 + $0xd8] sm:%s383]
                %411 = vst [vmem:[%s391 + $0x48] sm:%s383] %v410
                %v412 = vld [vmem:[%s390 + $0xf0] sm:%s383]
                %413 = vst [vmem:[%s391 + $0x50] sm:%s383] %v412
                %v414 = vld [vmem:[%s390 + $0x108] sm:%s383]
                %415 = vst [vmem:[%s391 + $0x58] sm:%s383] %v414
                %v416 = vld [vmem:[%s390 + $0x120] sm:%s383]
                %417 = vst [vmem:[%s391 + $0x60] sm:%s383] %v416
                %v418 = vld [vmem:[%s390 + $0x138] sm:%s383]
                %419 = vst [vmem:[%s391 + $0x68] sm:%s383] %v418
                %v420 = vld [vmem:[%s390 + $0x150] sm:%s383]
                %421 = vst [vmem:[%s391 + $0x70] sm:%s383] %v420
                %v422 = vld [vmem:[%s390 + $0x168] sm:%s383]
                %423 = vst [vmem:[%s391 + $0x78] sm:%s383] %v422
              $region87: #{feed_forward.1} parent=81 // loop_footer
                %s389 = sadd.s32 1, %s385
              $region88: #{feed_forward.1} parent=81 // loop_footer_branch
                %384 = sbr.rel target = $region84
              $region89: #{feed_forward.1} parent=81 // loop_exit
                _
            $region82: #{feed_forward.1} parent=73 // pred_fallthru
              _
          $region74: #{feed_forward.1} parent=69 // pred_fallthru
            _
          %468 = vnop
        $region70: #{feed_forward.1} parent=19 // pred_fallthru
          _
        // Predicated region
        $region105: #{feed_forward.1} parent=19 // pred_check
          %p469 = pneg %p149
        $region106: #{feed_forward.1} parent=19 // pred_check_branch
          %471 = sbr.rel (%p469) target = $region108
        $region107: #{feed_forward.1} parent=19 // pred_region
          %p472 = scmp.lt.s32.totalorder %s21, 2
          %s473 = scalar_select %p472, %s21, 2
          %s474 = scalar_lea.vmem %s4, %s473
        $region108: #{feed_forward.1} parent=19 // pred_fallthru
          _
        // Predicated region
        $region109: #{feed_forward.1} parent=19 // pred_check
          %p475 = pneg %p175
        $region110: #{feed_forward.1} parent=19 // pred_check_branch
          %477 = sbr.rel (%p475) target = $region112
        $region111: #{feed_forward.1} parent=19 // pred_region
          %s478 = smul.u32 16, %s21
          %p479 = scmp.lt.s32.totalorder %s478, 47
          %s480 = scalar_select %p479, %s478, 47
          %s481 = smul.addr %s480, 8
          %s482 = scalar_lea.vmem %s5, %s481
          %s483 = smul.u32 16, %s21
        $region112: #{feed_forward.1} parent=19 // pred_fallthru
          _
      $region20: #{feed_forward.1} parent=5 // pred_fallthru
        _
      %p484 = scmp.le.s32.totalorder 1, %s13
      %p485 = scmp.lt.s32.totalorder %s13, 7
      %p486 = pnand %p484, %p485
      %p487 = pneg %p486
      // Predicated region
      $region113: #{feed_forward.1} parent=5 // pred_check
        _
      $region114: #{feed_forward.1} parent=5 // pred_check_branch
        %489 = sbr.rel (%p486) target = $region116
      $region115: #{feed_forward.1} parent=5 // pred_region
        %s490 = ssub.s32 %s13, 1
        %s491 = sand.u32 %s64, 1
        %s492 = sand.u32 %s64, 1
        %s493 = smul.addr %s492, 128
        %s494 = scalar_lea.vmem [#allocation3], %s493
        // Predicated region
        $region117: #{feed_forward.1} parent=115 // pred_check
          %p495 = pneg %p77
        $region118: #{feed_forward.1} parent=115 // pred_check_branch
          %497 = sbr.rel (%p495) target = $region120
        $region119: #{feed_forward.1} parent=115 // pred_region
          _
        $region120: #{feed_forward.1} parent=115 // pred_fallthru
          _
        %s498 = sand.u32 %s116, 1
        %s499 = sand.u32 %s116, 1
        %s500 = smul.addr %s499, 128
        %s501 = scalar_lea.vmem [#allocation4], %s500
        // Predicated region
        $region121: #{feed_forward.1} parent=115 // pred_check
          %p502 = pneg %p129
        $region122: #{feed_forward.1} parent=115 // pred_check_branch
          %504 = sbr.rel (%p502) target = $region124
        $region123: #{feed_forward.1} parent=115 // pred_region
          _
        $region124: #{feed_forward.1} parent=115 // pred_fallthru
          _
        %s505 = smul.u32 2, %s22
        %p506 = scmp.lt.s32.totalorder %s505, 3
        %s507 = scalar_select %p506, %s505, 3
        %s508 = smul.addr %s507, 8
        %s509 = scalar_lea.vmem %s0, %s508
        %p510 = pneg %p51
        %p511 = pneg %p48
        %s512 = sand.u32 %s64, 1
        %s513 = sand.u32 %s64, 1
        %s514 = smul.addr %s513, 128
        %s515 = scalar_lea.vmem [#allocation3], %s514
        %p516 = pneg %p77
        %p517 = pneg %p74
        %p518 = scmp.lt.s32.totalorder %s23, 2
        %s519 = scalar_select %p518, %s23, 2
        %s520 = scalar_lea.vmem %s2, %s519
        %p521 = pneg %p103
        %p522 = pneg %p100
        %s523 = sand.u32 %s116, 1
        %s524 = sand.u32 %s116, 1
        %s525 = smul.addr %s524, 128
        %s526 = scalar_lea.vmem [#allocation4], %s525
        %p527 = pneg %p129
        %p528 = pneg %p126
        %p529 = scmp.lt.s32.totalorder %s23, 2
        %s530 = scalar_select %p529, %s23, 2
        %s531 = scalar_lea.vmem %s4, %s530
        %p532 = pneg %p155
        %p533 = pneg %p152
        %s534 = smul.u32 16, %s23
        %p535 = scmp.lt.s32.totalorder %s534, 47
        %s536 = scalar_select %p535, %s534, 47
        %s537 = smul.addr %s536, 8
        %s538 = scalar_lea.vmem %s5, %s537
        %p539 = pneg %p181
        %p540 = pneg %p178
        %p541 = pneg %p202
        %p542 = pneg %p199
        %p543 = pneg %p228
        %p544 = pneg %p225
        %s545 = smul.u32 2, %s22
        %p546 = scmp.lt.s32.totalorder %s545, 3
        %s547 = scalar_select %p546, %s545, 3
        %s548 = smul.addr %s547, 8
        %s549 = scalar_lea.vmem %s7, %s548
        %s550 = smul.u32 2, %s22
        %p551 = scmp.lt.s32.totalorder %s550, 3
        %s552 = scalar_select %p551, %s550, 3
        %s553 = smul.addr %s552, 8
        %s554 = scalar_lea.vmem %s0, %s553
        %s555 = smul.u32 2, %s22
        %p556 = scmp.lt.s32.totalorder %s23, 2
        %s557 = scalar_select %p556, %s23, 2
        %s558 = scalar_lea.vmem %s2, %s557
        %p559 = scmp.lt.s32.totalorder %s23, 2
        %s560 = scalar_select %p559, %s23, 2
        %s561 = scalar_lea.vmem %s4, %s560
        %s562 = smul.u32 16, %s23
        %p563 = scmp.lt.s32.totalorder %s562, 47
        %s564 = scalar_select %p563, %s562, 47
        %s565 = smul.addr %s564, 8
        %s566 = scalar_lea.vmem %s5, %s565
        %s567 = smul.u32 16, %s23
        %s568 = smul.u32 2, %s22
        %p569 = scmp.lt.s32.totalorder %s568, 3
        %s570 = scalar_select %p569, %s568, 3
        %s571 = smul.addr %s570, 8
        %s572 = scalar_lea.vmem %s7, %s571
        %s573 = smul.u32 2, %s22
        %p574 = scmp.eq.s32.totalorder %s23, 0
        // Predicated region
        $region125: #{feed_forward.1} parent=115 // pred_check
          %p575 = pneg %p574
        $region126: #{feed_forward.1} parent=115 // pred_check_branch
          %577 = sbr.rel (%p575) target = $region128
        $region127: #{feed_forward.1} parent=115 // pred_region
          %578 = vst [vmem:[#allocation2] sm:$0xff] 0.0
          %579 = vst [vmem:[#allocation2 + $0x8] sm:$0xff] 0.0
        $region128: #{feed_forward.1} parent=115 // pred_fallthru
          _
        %v580 = vld [vmem:[%s554] sm:$0xff]
        %v581 = vld [vmem:[%s554 + $0x8] sm:$0xff]
        %v582 = vld [vmem:[%s494] sm:$0xff]
        %v583 = vld [vmem:[%s494 + $0x8] sm:$0xff]
        %v584 = vld [vmem:[%s494 + $0x10] sm:$0xff]
        %v585 = vld [vmem:[%s494 + $0x18] sm:$0xff]
        %v586 = vld [vmem:[%s494 + $0x20] sm:$0xff]
        %v587 = vld [vmem:[%s494 + $0x28] sm:$0xff]
        %v588 = vld [vmem:[%s494 + $0x30] sm:$0xff]
        %v589 = vld [vmem:[%s494 + $0x38] sm:$0xff]
        %v590 = vld [vmem:[%s494 + $0x40] sm:$0xff]
        %v591 = vld [vmem:[%s494 + $0x48] sm:$0xff]
        %v592 = vld [vmem:[%s494 + $0x50] sm:$0xff]
        %v593 = vld [vmem:[%s494 + $0x58] sm:$0xff]
        %v594 = vld [vmem:[%s494 + $0x60] sm:$0xff]
        %v595 = vld [vmem:[%s494 + $0x68] sm:$0xff]
        %v596 = vld [vmem:[%s494 + $0x70] sm:$0xff]
        %v597 = vld [vmem:[%s494 + $0x78] sm:$0xff]
        %v598 = vld [vmem:[%s558] sm:$0x1]
        %v600 = vlaneseq
        %v601 = vshrl.u32 %v600, 7
        %v602 = vsub.s32 0, %v601
        %v603 = vrot.slane %v598, %v602
        %605 = vmatprep.subr.mxu0 0.0
        %606 = vmatpush1.msra.mxu0 %v597
        %607 = vmatprep.subr.mxu0 0.0
        %608 = vmatpush1.msra.mxu0 %v596
        %609 = vmatprep.subr.mxu0 0.0
        %610 = vmatpush1.msra.mxu0 %v595
        %611 = vmatprep.subr.mxu0 0.0
        %612 = vmatpush1.msra.mxu0 %v594
        %613 = vmatprep.subr.mxu0 0.0
        %614 = vmatpush1.msra.mxu0 %v593
        %615 = vmatprep.subr.mxu0 0.0
        %616 = vmatpush1.msra.mxu0 %v592
        %617 = vmatprep.subr.mxu0 0.0
        %618 = vmatpush1.msra.mxu0 %v591
        %619 = vmatprep.subr.mxu0 0.0
        %620 = vmatpush1.msra.mxu0 %v590
        %621 = vmatprep.subr.mxu0 0.0
        %622 = vmatpush1.msra.mxu0 %v589
        %623 = vmatprep.subr.mxu0 0.0
        %624 = vmatpush1.msra.mxu0 %v588
        %625 = vmatprep.subr.mxu0 0.0
        %626 = vmatpush1.msra.mxu0 %v587
        %627 = vmatprep.subr.mxu0 0.0
        %628 = vmatpush1.msra.mxu0 %v586
        %629 = vmatprep.subr.mxu0 0.0
        %630 = vmatpush1.msra.mxu0 %v585
        %631 = vmatprep.subr.mxu0 0.0
        %632 = vmatpush1.msra.mxu0 %v584
        %633 = vmatprep.subr.mxu0 0.0
        %634 = vmatpush1.msra.mxu0 %v583
        %635 = vmatprep.subr.mxu0 0.0
        %636 = vmatpush1.msra.mxu0 %v582
        %637 = vmatprep.subr.mxu0 0.0
        %638 = vmatpush2.msra.mxu0 0.0
        %639 = vmatprep.subr.mxu0 0.0
        %640 = vmatpush2.msra.mxu0 0.0
        %641 = vmatprep.subr.mxu0 0.0
        %642 = vmatpush2.msra.mxu0 0.0
        %643 = vmatprep.subr.mxu0 0.0
        %644 = vmatpush2.msra.mxu0 0.0
        %645 = vmatprep.subr.mxu0 0.0
        %646 = vmatpush2.msra.mxu0 0.0
        %647 = vmatprep.subr.mxu0 0.0
        %648 = vmatpush2.msra.mxu0 0.0
        %649 = vmatprep.subr.mxu0 0.0
        %650 = vmatpush2.msra.mxu0 0.0
        %651 = vmatprep.subr.mxu0 0.0
        %652 = vmatpush2.msra.mxu0 0.0
        %653 = vmatprep.subr.mxu0 0.0
        %654 = vmatpush2.msra.mxu0 0.0
        %655 = vmatprep.subr.mxu0 0.0
        %656 = vmatpush2.msra.mxu0 0.0
        %657 = vmatprep.subr.mxu0 0.0
        %658 = vmatpush2.msra.mxu0 0.0
        %659 = vmatprep.subr.mxu0 0.0
        %660 = vmatpush2.msra.mxu0 0.0
        %661 = vmatprep.subr.mxu0 0.0
        %662 = vmatpush2.msra.mxu0 0.0
        %663 = vmatprep.subr.mxu0 0.0
        %664 = vmatpush2.msra.mxu0 0.0
        %665 = vmatprep.subr.mxu0 0.0
        %666 = vmatpush2.msra.mxu0 0.0
        %667 = vmatprep.subr.mxu0 0.0
        %668 = vmatpush2.msra.mxu0 0.0
        %669 = vmatprep.mubr.f32.mxu0 0.0
        %670 = vmatmul.mubr.f32.gmra.mxu0 %v580
        %v671 = vpop.f32.mrf.mxu0
        %v672 = vadd.f32 %v603, %v671
        %v673 = vpop.f32.mrf.mxu0
        %674 = vmatprep.mubr.f32.mxu0 0.0
        %675 = vmatmul.mubr.f32.gmra.mxu0 %v581
        %v676 = vpop.f32.mrf.mxu0
        %v677 = vadd.f32 %v603, %v676
        %v678 = vpop.f32.mrf.mxu0
        %679 = vdwg.mxu0
        %v680 = vld [vmem:[%s501] sm:$0xff]
        %v681 = vld [vmem:[%s501 + $0x8] sm:$0xff]
        %v682 = vld [vmem:[%s501 + $0x10] sm:$0xff]
        %v683 = vld [vmem:[%s501 + $0x18] sm:$0xff]
        %v684 = vld [vmem:[%s501 + $0x20] sm:$0xff]
        %v685 = vld [vmem:[%s501 + $0x28] sm:$0xff]
        %v686 = vld [vmem:[%s501 + $0x30] sm:$0xff]
        %v687 = vld [vmem:[%s501 + $0x38] sm:$0xff]
        %v688 = vld [vmem:[%s501 + $0x40] sm:$0xff]
        %v689 = vld [vmem:[%s501 + $0x48] sm:$0xff]
        %v690 = vld [vmem:[%s501 + $0x50] sm:$0xff]
        %v691 = vld [vmem:[%s501 + $0x58] sm:$0xff]
        %v692 = vld [vmem:[%s501 + $0x60] sm:$0xff]
        %v693 = vld [vmem:[%s501 + $0x68] sm:$0xff]
        %v694 = vld [vmem:[%s501 + $0x70] sm:$0xff]
        %v695 = vld [vmem:[%s501 + $0x78] sm:$0xff]
        %v696 = vld [vmem:[%s561] sm:$0x1]
        %v698 = vlaneseq
        %v699 = vshrl.u32 %v698, 7
        %v700 = vsub.s32 0, %v699
        %v701 = vrot.slane %v696, %v700
        %703 = vmatprep.subr.mxu0 0.0
        %704 = vmatpush1.msra.mxu0 %v695
        %705 = vmatprep.subr.mxu0 0.0
        %706 = vmatpush1.msra.mxu0 %v694
        %707 = vmatprep.subr.mxu0 0.0
        %708 = vmatpush1.msra.mxu0 %v693
        %709 = vmatprep.subr.mxu0 0.0
        %710 = vmatpush1.msra.mxu0 %v692
        %711 = vmatprep.subr.mxu0 0.0
        %712 = vmatpush1.msra.mxu0 %v691
        %713 = vmatprep.subr.mxu0 0.0
        %714 = vmatpush1.msra.mxu0 %v690
        %715 = vmatprep.subr.mxu0 0.0
        %716 = vmatpush1.msra.mxu0 %v689
        %717 = vmatprep.subr.mxu0 0.0
        %718 = vmatpush1.msra.mxu0 %v688
        %719 = vmatprep.subr.mxu0 0.0
        %720 = vmatpush1.msra.mxu0 %v687
        %721 = vmatprep.subr.mxu0 0.0
        %722 = vmatpush1.msra.mxu0 %v686
        %723 = vmatprep.subr.mxu0 0.0
        %724 = vmatpush1.msra.mxu0 %v685
        %725 = vmatprep.subr.mxu0 0.0
        %726 = vmatpush1.msra.mxu0 %v684
        %727 = vmatprep.subr.mxu0 0.0
        %728 = vmatpush1.msra.mxu0 %v683
        %729 = vmatprep.subr.mxu0 0.0
        %730 = vmatpush1.msra.mxu0 %v682
        %731 = vmatprep.subr.mxu0 0.0
        %732 = vmatpush1.msra.mxu0 %v681
        %733 = vmatprep.subr.mxu0 0.0
        %734 = vmatpush1.msra.mxu0 %v680
        %735 = vmatprep.subr.mxu0 0.0
        %736 = vmatpush2.msra.mxu0 0.0
        %737 = vmatprep.subr.mxu0 0.0
        %738 = vmatpush2.msra.mxu0 0.0
        %739 = vmatprep.subr.mxu0 0.0
        %740 = vmatpush2.msra.mxu0 0.0
        %741 = vmatprep.subr.mxu0 0.0
        %742 = vmatpush2.msra.mxu0 0.0
        %743 = vmatprep.subr.mxu0 0.0
        %744 = vmatpush2.msra.mxu0 0.0
        %745 = vmatprep.subr.mxu0 0.0
        %746 = vmatpush2.msra.mxu0 0.0
        %747 = vmatprep.subr.mxu0 0.0
        %748 = vmatpush2.msra.mxu0 0.0
        %749 = vmatprep.subr.mxu0 0.0
        %750 = vmatpush2.msra.mxu0 0.0
        %751 = vmatprep.subr.mxu0 0.0
        %752 = vmatpush2.msra.mxu0 0.0
        %753 = vmatprep.subr.mxu0 0.0
        %754 = vmatpush2.msra.mxu0 0.0
        %755 = vmatprep.subr.mxu0 0.0
        %756 = vmatpush2.msra.mxu0 0.0
        %757 = vmatprep.subr.mxu0 0.0
        %758 = vmatpush2.msra.mxu0 0.0
        %759 = vmatprep.subr.mxu0 0.0
        %760 = vmatpush2.msra.mxu0 0.0
        %761 = vmatprep.subr.mxu0 0.0
        %762 = vmatpush2.msra.mxu0 0.0
        %763 = vmatprep.subr.mxu0 0.0
        %764 = vmatpush2.msra.mxu0 0.0
        %765 = vmatprep.subr.mxu0 0.0
        %766 = vmatpush2.msra.mxu0 0.0
        %767 = vmatprep.mubr.f32.mxu0 0.0
        %768 = vmatmul.mubr.f32.gmra.mxu0 %v580
        %v769 = vpop.f32.mrf.mxu0
        %v770 = vadd.f32 %v701, %v769
        %v771 = vpop.f32.mrf.mxu0
        %772 = vmatprep.mubr.f32.mxu0 0.0
        %773 = vmatmul.mubr.f32.gmra.mxu0 %v581
        %v774 = vpop.f32.mrf.mxu0
        %v775 = vadd.f32 %v701, %v774
        %v776 = vpop.f32.mrf.mxu0
        %777 = vdwg.mxu0
        %v778 = vxor.u32 %v672, 2147483648
        %v779 = vxor.u32 %v677, 2147483648
        %v780 = vmul.f32 %v778, 1.442695
        %v781 = vpow.pop %v780
        %v782 = vmul.f32 %v779, 1.442695
        %v783 = vpow.pop %v782
        %v784 = vadd.f32 %v781, 1.0
        %v785 = vadd.f32 %v783, 1.0
        %v786 = vrcp.pop %v784
        %v787 = vmul.f32 1.0, %v786
        %v788 = vrcp.pop %v785
        %v789 = vmul.f32 1.0, %v788
        %v790 = vmul.f32 %v672, %v787
        %v791 = vmul.f32 %v677, %v789
        %v792 = vmul.f32 %v790, %v770
        %v793 = vmul.f32 %v791, %v775
        %v794 = vld [vmem:[#allocation2] sm:$0xff]
        %v795 = vld [vmem:[#allocation2 + $0x8] sm:$0xff]
        %v796 = vld [vmem:[%s566] sm:$0xff]
        %v797 = vld [vmem:[%s566 + $0x8] sm:$0xff]
        %v798 = vld [vmem:[%s566 + $0x10] sm:$0xff]
        %v799 = vld [vmem:[%s566 + $0x18] sm:$0xff]
        %v800 = vld [vmem:[%s566 + $0x20] sm:$0xff]
        %v801 = vld [vmem:[%s566 + $0x28] sm:$0xff]
        %v802 = vld [vmem:[%s566 + $0x30] sm:$0xff]
        %v803 = vld [vmem:[%s566 + $0x38] sm:$0xff]
        %v804 = vld [vmem:[%s566 + $0x40] sm:$0xff]
        %v805 = vld [vmem:[%s566 + $0x48] sm:$0xff]
        %v806 = vld [vmem:[%s566 + $0x50] sm:$0xff]
        %v807 = vld [vmem:[%s566 + $0x58] sm:$0xff]
        %v808 = vld [vmem:[%s566 + $0x60] sm:$0xff]
        %v809 = vld [vmem:[%s566 + $0x68] sm:$0xff]
        %v810 = vld [vmem:[%s566 + $0x70] sm:$0xff]
        %v811 = vld [vmem:[%s566 + $0x78] sm:$0xff]
        %812 = vmatprep.subr.mxu0 0.0
        %813 = vmatpush1.msra.mxu0 %v811
        %814 = vmatprep.subr.mxu0 0.0
        %815 = vmatpush1.msra.mxu0 %v810
        %816 = vmatprep.subr.mxu0 0.0
        %817 = vmatpush1.msra.mxu0 %v809
        %818 = vmatprep.subr.mxu0 0.0
        %819 = vmatpush1.msra.mxu0 %v808
        %820 = vmatprep.subr.mxu0 0.0
        %821 = vmatpush1.msra.mxu0 %v807
        %822 = vmatprep.subr.mxu0 0.0
        %823 = vmatpush1.msra.mxu0 %v806
        %824 = vmatprep.subr.mxu0 0.0
        %825 = vmatpush1.msra.mxu0 %v805
        %826 = vmatprep.subr.mxu0 0.0
        %827 = vmatpush1.msra.mxu0 %v804
        %828 = vmatprep.subr.mxu0 0.0
        %829 = vmatpush1.msra.mxu0 %v803
        %830 = vmatprep.subr.mxu0 0.0
        %831 = vmatpush1.msra.mxu0 %v802
        %832 = vmatprep.subr.mxu0 0.0
        %833 = vmatpush1.msra.mxu0 %v801
        %834 = vmatprep.subr.mxu0 0.0
        %835 = vmatpush1.msra.mxu0 %v800
        %836 = vmatprep.subr.mxu0 0.0
        %837 = vmatpush1.msra.mxu0 %v799
        %838 = vmatprep.subr.mxu0 0.0
        %839 = vmatpush1.msra.mxu0 %v798
        %840 = vmatprep.subr.mxu0 0.0
        %841 = vmatpush1.msra.mxu0 %v797
        %842 = vmatprep.subr.mxu0 0.0
        %843 = vmatpush1.msra.mxu0 %v796
        %844 = vmatprep.subr.mxu0 0.0
        %845 = vmatpush2.msra.mxu0 0.0
        %846 = vmatprep.subr.mxu0 0.0
        %847 = vmatpush2.msra.mxu0 0.0
        %848 = vmatprep.subr.mxu0 0.0
        %849 = vmatpush2.msra.mxu0 0.0
        %850 = vmatprep.subr.mxu0 0.0
        %851 = vmatpush2.msra.mxu0 0.0
        %852 = vmatprep.subr.mxu0 0.0
        %853 = vmatpush2.msra.mxu0 0.0
        %854 = vmatprep.subr.mxu0 0.0
        %855 = vmatpush2.msra.mxu0 0.0
        %856 = vmatprep.subr.mxu0 0.0
        %857 = vmatpush2.msra.mxu0 0.0
        %858 = vmatprep.subr.mxu0 0.0
        %859 = vmatpush2.msra.mxu0 0.0
        %860 = vmatprep.subr.mxu0 0.0
        %861 = vmatpush2.msra.mxu0 0.0
        %862 = vmatprep.subr.mxu0 0.0
        %863 = vmatpush2.msra.mxu0 0.0
        %864 = vmatprep.subr.mxu0 0.0
        %865 = vmatpush2.msra.mxu0 0.0
        %866 = vmatprep.subr.mxu0 0.0
        %867 = vmatpush2.msra.mxu0 0.0
        %868 = vmatprep.subr.mxu0 0.0
        %869 = vmatpush2.msra.mxu0 0.0
        %870 = vmatprep.subr.mxu0 0.0
        %871 = vmatpush2.msra.mxu0 0.0
        %872 = vmatprep.subr.mxu0 0.0
        %873 = vmatpush2.msra.mxu0 0.0
        %874 = vmatprep.subr.mxu0 0.0
        %875 = vmatpush2.msra.mxu0 0.0
        %876 = vmatprep.mubr.f32.mxu0 0.0
        %877 = vmatmul.mubr.f32.gmra.mxu0 %v792
        %v878 = vpop.f32.mrf.mxu0
        %v879 = vadd.f32 0.0, %v878
        %v880 = vpop.f32.mrf.mxu0
        %881 = vmatprep.mubr.f32.mxu0 0.0
        %882 = vmatmul.mubr.f32.gmra.mxu0 %v793
        %v883 = vpop.f32.mrf.mxu0
        %v884 = vadd.f32 0.0, %v883
        %v885 = vpop.f32.mrf.mxu0
        %886 = vdwg.mxu0
        %v887 = vadd.f32 %v794, %v879
        %v888 = vadd.f32 %v795, %v884
        %889 = vst [vmem:[#allocation2] sm:$0xff] %v887
        %890 = vst [vmem:[#allocation2 + $0x8] sm:$0xff] %v888
        %p891 = scmp.eq.s32.totalorder %s23, 2
        // Predicated region
        $region129: #{feed_forward.1} parent=115 // pred_check
          %p892 = pneg %p891
        $region130: #{feed_forward.1} parent=115 // pred_check_branch
          %894 = sbr.rel (%p892) target = $region132
        $region131: #{feed_forward.1} parent=115 // pred_region
          %v895 = vld [vmem:[#allocation2] sm:$0xff]
          %v896 = vld [vmem:[#allocation2 + $0x8] sm:$0xff]
          %v897 = vld [vmem:[%s6] sm:$0x1]
          %v899 = vlaneseq
          %v900 = vshrl.u32 %v899, 7
          %v901 = vsub.s32 0, %v900
          %v902 = vrot.slane %v897, %v901
          %v904 = vadd.f32 %v895, %v902
          %v905 = vadd.f32 %v896, %v902
          %906 = vst [vmem:[%s572] sm:$0xff] %v904
          %907 = vst [vmem:[%s572 + $0x8] sm:$0xff] %v905
        $region132: #{feed_forward.1} parent=115 // pred_fallthru
          _
        %s908 = smul.u32 2, %s22
        %p909 = scmp.lt.s32.totalorder %s908, 3
        %s910 = scalar_select %p909, %s908, 3
        %s911 = smul.addr %s910, 8
        %s912 = scalar_lea.vmem %s7, %s911
        // Predicated region
        $region133: #{feed_forward.1} parent=115 // pred_check
          %p913 = pneg %p225
        $region134: #{feed_forward.1} parent=115 // pred_check_branch
          %915 = sbr.rel (%p913) target = $region136
        $region135: #{feed_forward.1} parent=115 // pred_region
          %s916 = smul.u32 2, %s22
        $region136: #{feed_forward.1} parent=115 // pred_fallthru
          _
      $region116: #{feed_forward.1} parent=5 // pred_fallthru
        _
      %p917 = scmp.le.s32.totalorder 2, %s13
      // Predicated region
      $region137: #{feed_forward.1} parent=5 // pred_check
        %p918 = pneg %p917
      $region138: #{feed_forward.1} parent=5 // pred_check_branch
        %920 = sbr.rel (%p918) target = $region140
      $region139: #{feed_forward.1} parent=5 // pred_region
        %s921 = ssub.s32 %s13, 2
        // Predicated region
        $region141: #{feed_forward.1} parent=139 // pred_check
          %p922 = pneg %p231
        $region142: #{feed_forward.1} parent=139 // pred_check_branch
          %924 = sbr.rel (%p922) target = $region144
        $region143: #{feed_forward.1} parent=139 // pred_region
          %s925 = smul.u32 2, %s24
          %p926 = scmp.lt.s32.totalorder %s925, 3
          %s927 = scalar_select %p926, %s925, 3
          %s928 = smul.addr %s927, 8
          %s929 = scalar_lea.vmem %s7, %s928
        $region144: #{feed_forward.1} parent=139 // pred_fallthru
          _
      $region140: #{feed_forward.1} parent=5 // pred_fallthru
        _
    $region6: #{feed_forward.1} parent=1 // loop_footer
      %s17 = sadd.s32 1, %s13
    $region7: #{feed_forward.1} parent=1 // loop_footer_branch
      %12 = sbr.rel target = $region3
    $region8: #{feed_forward.1} parent=1 // loop_exit
      _

</llo_original>
